<compile_context>
chip_gen: v5e
topology: v5e:2x2
jax: 0.10.0
libtpu: 0.0.40
codegen_flags: <defaults>
</compile_context>

<pallas_src>
import functools

import jax
import jax.numpy as jnp
from jax.experimental import pallas as pl
from jax.experimental.pallas import tpu as pltpu

_TILE_LANES = 1024   # last-dim tile width, multiple of 128 (lane-dense stores)
_TILE_ROWS = 256     # sublane rows per tile -> 256x1024 f32 = 1 MiB per buffer


def _add_noise_kernel(x_ref, z_ref, o_ref, *, mean, std):
    """out = x + (mean + std * z), elementwise on one lane-dense VMEM tile."""
    noise = jnp.float32(mean) + jnp.float32(std) * z_ref[...].astype(jnp.float32)
    o_ref[...] = (x_ref[...].astype(jnp.float32) + noise).astype(o_ref.dtype)


def gaussian_noise(x, key, *, std, mean=0.0, training=True):
    """Pallas-backed GaussianNoise.forward.

    x        : f32[batch, input_dim] (any shape works; treated elementwise)
    key      : jax.random PRNG key -- fresh noise per call (vary key per step)
    training : if False, returns x unchanged (matches nn.Module eval mode)
    """
    if not training:
        return x

    # Standard-normal draw; the (mean, std) affine is fused into the kernel.
    # TODO(synk): on-chip pltpu.prng_seed/stateful_normal would remove this extra
    # HBM stream, but those TPU PRNG primitives have no CPU/interpret lowering.
    z = jax.random.normal(key, x.shape, dtype=jnp.float32)

    # Flatten to a lane-dense 2-D slab: last dim = _TILE_LANES (multiple of 128),
    # row count padded to a multiple of 8 so block shapes satisfy (8, 128) tiling.
    n = x.size
    lanes = _TILE_LANES
    n_pad = pl.cdiv(n, 8 * lanes) * (8 * lanes)
    pad = n_pad - n
    x2 = jnp.pad(x.reshape(-1), (0, pad)).reshape(-1, lanes)
    z2 = jnp.pad(z.reshape(-1), (0, pad)).reshape(-1, lanes)
    rows = x2.shape[0]
    tile_rows = min(_TILE_ROWS, rows)   # rows is a multiple of 8

    kernel = functools.partial(_add_noise_kernel, mean=float(mean), std=float(std))

    out2 = pl.pallas_call(
        kernel,
        out_shape=jax.ShapeDtypeStruct((rows, lanes), x.dtype),
        grid=(pl.cdiv(rows, tile_rows),),
        in_specs=[
            pl.BlockSpec((tile_rows, lanes), lambda i: (i, 0)),   # x tile
            pl.BlockSpec((tile_rows, lanes), lambda i: (i, 0)),   # noise tile
        ],
        out_specs=pl.BlockSpec((tile_rows, lanes), lambda i: (i, 0)),
        compiler_params=pltpu.CompilerParams(
            dimension_semantics=("parallel",),        # v7x: shard across 2 TCs
            vmem_limit_bytes=32 * 1024 * 1024,        # safe on v5e/v6e/v7x
        ),
    )(x2, z2)

    return out2.reshape(-1)[:n].reshape(x.shape)


if __name__ == "__main__":
    key = jax.random.PRNGKey(0)
    k_x, k_noise = jax.random.split(key)

    batch_size, input_dim = 4, 32
    std, mean = 0.3, 0.1

    x = jax.random.normal(k_x, (batch_size, input_dim), dtype=jnp.float32)

    # Training mode: noise added by the Pallas kernel.
    y_train = gaussian_noise(x, k_noise, std=std, mean=mean, training=True)
    y_train = jax.block_until_ready(y_train)

    # Eval mode: identity (matches the PyTorch module when not self.training).
    y_eval = gaussian_noise(x, k_noise, std=std, mean=mean, training=False)
    y_eval = jax.block_until_ready(y_eval)

    # Exact reference: same key -> same standard-normal draw.
    z_ref = jax.random.normal(k_noise, x.shape, dtype=jnp.float32)
    y_ref = x + (mean + std * z_ref)

    assert y_train.shape == x.shape and y_train.dtype == x.dtype
    assert bool(jnp.all(y_eval == x))
    assert bool(jnp.allclose(y_train, y_ref, atol=1e-6, rtol=1e-6))
    assert not bool(jnp.all(y_train == x))

    print("KERNEL_OK")
</pallas_src>

<mosaic_0001>
module attributes {stable_mosaic.version = 11 : i64} {
  func.func @_add_noise_kernel(%arg0: i32, %arg1: memref<8x1024xf32, #tpu.memory_space<vmem>>, %arg2: memref<8x1024xf32, #tpu.memory_space<vmem>>, %arg3: memref<8x1024xf32, #tpu.memory_space<vmem>>) attributes {dimension_semantics = [#tpu.dimension_semantics<parallel>], iteration_bounds = array<i64: 1>, scalar_prefetch = 0 : i64, scratch_operands = 0 : i64, tpu.core_type = #tpu.core_type<tc>, window_params = [{transform_indices = @transform_0, window_bounds = array<i64: 8, 1024>}, {transform_indices = @transform_1, window_bounds = array<i64: 8, 1024>}, {transform_indices = @transform_2, window_bounds = array<i64: 8, 1024>}]} {
    %c0 = arith.constant 0 : index
    %c0_0 = arith.constant 0 : index
    %0 = vector.load %arg2[%c0, %c0_0] : memref<8x1024xf32, #tpu.memory_space<vmem>>, vector<8x1024xf32>
    %cst = arith.constant 3.000000e-01 : f32
    %1 = vector.broadcast %cst : f32 to vector<8x1024xf32>
    %2 = arith.mulf %1, %0 : vector<8x1024xf32>
    %cst_1 = arith.constant 1.000000e-01 : f32
    %3 = vector.broadcast %cst_1 : f32 to vector<8x1024xf32>
    %4 = arith.addf %3, %2 : vector<8x1024xf32>
    %c0_2 = arith.constant 0 : index
    %c0_3 = arith.constant 0 : index
    %5 = vector.load %arg1[%c0_2, %c0_3] : memref<8x1024xf32, #tpu.memory_space<vmem>>, vector<8x1024xf32>
    %6 = arith.addf %5, %4 : vector<8x1024xf32>
    %c0_4 = arith.constant 0 : index
    %c0_5 = arith.constant 0 : index
    %7 = vector.load %arg3[%c0_4, %c0_5] : memref<8x1024xf32, #tpu.memory_space<vmem>>, vector<8x1024xf32>
    tpu.vector_store %arg3[%c0_4, %c0_5], %6 {strides = array<i32>} : memref<8x1024xf32, #tpu.memory_space<vmem>>, vector<8x1024xf32>,
    return
  }
  func.func @transform_0(%arg0: i32) -> (i32, i32) {
    %c0_i32 = arith.constant 0 : i32
    %c0_i32_0 = arith.constant 0 : i32
    return %arg0, %c0_i32 : i32, i32
  }
  func.func @transform_1(%arg0: i32) -> (i32, i32) {
    %c0_i32 = arith.constant 0 : i32
    %c0_i32_0 = arith.constant 0 : i32
    return %arg0, %c0_i32 : i32, i32
  }
  func.func @transform_2(%arg0: i32) -> (i32, i32) {
    %c0_i32 = arith.constant 0 : i32
    %c0_i32_0 = arith.constant 0 : i32
    return %arg0, %c0_i32 : i32, i32
  }
}

</mosaic_0001>

<llo_original>
// kernel: tpu_custom_call.1
$region0: #{tpu_custom_call.1}
  #allocation0 [shape = 'u32[]', space=smem, size = 0x4, offset = 0x4, fixed_abs, tag = 'smem constant byte address 0x4 - core index']
  #allocation1 [shape = 'u32[72,128]{1,0:T(1,128)}', space=vmem, size = 0x9000, scoped, tag = 'internal scratch']
  %s0 = inlined_call_operand.hbm [shape: f32[8,1024], index: 0, kind: input, shape index: {}]
  %s1 = inlined_call_operand.hbm [shape: f32[8,1024], index: 1, kind: input, shape index: {}]
  %s2 = inlined_call_operand.hbm [shape: f32[8,1024], index: 2, kind: output, shape index: {}]
  %s3 = sld [smem:[#allocation0]]
  $region26: #{tpu_custom_call.1} parent=0
    _
  %s5 = ssub.s32 1, %s3
  %s6 = scalar_select 0, %s5, %s3
  $region1: #{tpu_custom_call.1} parent=0
    #allocation2 [shape = 'u8[32768]{0}', space=vmem, size = 0x8000, scoped, tag = 'input window, operand 0, single buffered']
    #allocation3 [shape = 's32[1]{0}', space=sflag, size = 0x4, scoped, tag = 'scoped memory for tpu_custom_call.1']
    #allocation4 [shape = 's32[1]{0}', space=sflag, size = 0x4, scoped, tag = 'scoped memory for tpu_custom_call.1']
    #allocation5 [shape = 'u8[32768]{0}', space=vmem, size = 0x8000, scoped, tag = 'input window, operand 1, single buffered']
    #allocation6 [shape = 's32[1]{0}', space=sflag, size = 0x4, scoped, tag = 'scoped memory for tpu_custom_call.1']
    #allocation7 [shape = 'u8[32768]{0}', space=vmem, size = 0x8000, scoped, tag = 'output window, operand 0, single buffered']
    %7 = vsyncpa [#allocation3], 0
    %8 = vsyncpa [#allocation6], 0
    %9 = vsyncpa [#allocation4], 0
    // Predicated region
    $region2: #{tpu_custom_call.1} parent=1 // pred_check
      _
    $region3: #{tpu_custom_call.1} parent=1 // pred_check_branch
      %11 = sbr.rel (0) target = $region5
    $region4: #{tpu_custom_call.1} parent=1 // pred_region
      %13 = vsyncadd [#allocation3], 0
      %s15 = sshll.u32 %s0, 4
      %s16 = int_to_ptr.hbm [resolvable:$true] %s15
      %s17 = sshll.u32 [#allocation2], 4
      %s18 = int_to_ptr.vmem [resolvable:$true] %s17
      %20 = dma.hbm_to_vmem [thread:$0]  %s16, 1024, %s18, [#allocation3]
    $region5: #{tpu_custom_call.1} parent=1 // pred_fallthru
      _
    // Predicated region
    $region6: #{tpu_custom_call.1} parent=1 // pred_check
      _
    $region7: #{tpu_custom_call.1} parent=1 // pred_check_branch
      %22 = sbr.rel (0) target = $region9
    $region8: #{tpu_custom_call.1} parent=1 // pred_region
      %24 = vsyncadd [#allocation6], 0
      %s26 = sshll.u32 %s1, 4
      %s27 = int_to_ptr.hbm [resolvable:$true] %s26
      %s28 = sshll.u32 [#allocation5], 4
      %s29 = int_to_ptr.vmem [resolvable:$true] %s28
      %31 = dma.hbm_to_vmem [thread:$0]  %s27, 1024, %s29, [#allocation6]
    $region9: #{tpu_custom_call.1} parent=1 // pred_fallthru
      _
    // Predicated region
    $region10: #{tpu_custom_call.1} parent=1 // pred_check
      _
    $region11: #{tpu_custom_call.1} parent=1 // pred_check_branch
      %33 = sbr.rel (0) target = $region13
    $region12: #{tpu_custom_call.1} parent=1 // pred_region
      %35 = dma.done [#allocation3], 1024
    $region13: #{tpu_custom_call.1} parent=1 // pred_fallthru
      _
    // Predicated region
    $region14: #{tpu_custom_call.1} parent=1 // pred_check
      _
    $region15: #{tpu_custom_call.1} parent=1 // pred_check_branch
      %37 = sbr.rel (0) target = $region17
    $region16: #{tpu_custom_call.1} parent=1 // pred_region
      %39 = dma.done [#allocation6], 1024
    $region17: #{tpu_custom_call.1} parent=1 // pred_fallthru
      _
    %v40 = vld [vmem:[#allocation5] sm:$0xff]
    %v41 = vld [vmem:[#allocation5 + $0x8] sm:$0xff]
    %v42 = vld [vmem:[#allocation5 + $0x10] sm:$0xff]
    %v43 = vld [vmem:[#allocation5 + $0x18] sm:$0xff]
    %v44 = vld [vmem:[#allocation5 + $0x20] sm:$0xff]
    %v45 = vld [vmem:[#allocation5 + $0x28] sm:$0xff]
    %v46 = vld [vmem:[#allocation5 + $0x30] sm:$0xff]
    %v47 = vld [vmem:[#allocation5 + $0x38] sm:$0xff]
    %v48 = vmul.f32 %v40, 0.3
    %v49 = vmul.f32 %v41, 0.3
    %v50 = vmul.f32 %v42, 0.3
    %v51 = vmul.f32 %v43, 0.3
    %v52 = vmul.f32 %v44, 0.3
    %v53 = vmul.f32 %v45, 0.3
    %v54 = vmul.f32 %v46, 0.3
    %v55 = vmul.f32 %v47, 0.3
    %v56 = vadd.f32 %v48, 0.1
    %v57 = vadd.f32 %v49, 0.1
    %v58 = vadd.f32 %v50, 0.1
    %v59 = vadd.f32 %v51, 0.1
    %v60 = vadd.f32 %v52, 0.1
    %v61 = vadd.f32 %v53, 0.1
    %v62 = vadd.f32 %v54, 0.1
    %v63 = vadd.f32 %v55, 0.1
    %v64 = vld [vmem:[#allocation2] sm:$0xff]
    %v65 = vld [vmem:[#allocation2 + $0x8] sm:$0xff]
    %v66 = vld [vmem:[#allocation2 + $0x10] sm:$0xff]
    %v67 = vld [vmem:[#allocation2 + $0x18] sm:$0xff]
    %v68 = vld [vmem:[#allocation2 + $0x20] sm:$0xff]
    %v69 = vld [vmem:[#allocation2 + $0x28] sm:$0xff]
    %v70 = vld [vmem:[#allocation2 + $0x30] sm:$0xff]
    %v71 = vld [vmem:[#allocation2 + $0x38] sm:$0xff]
    %v72 = vadd.f32 %v64, %v56
    %v73 = vadd.f32 %v65, %v57
    %v74 = vadd.f32 %v66, %v58
    %v75 = vadd.f32 %v67, %v59
    %v76 = vadd.f32 %v68, %v60
    %v77 = vadd.f32 %v69, %v61
    %v78 = vadd.f32 %v70, %v62
    %v79 = vadd.f32 %v71, %v63
    %80 = vst [vmem:[#allocation7] sm:$0xff] %v72
    %81 = vst [vmem:[#allocation7 + $0x8] sm:$0xff] %v73
    %82 = vst [vmem:[#allocation7 + $0x10] sm:$0xff] %v74
    %83 = vst [vmem:[#allocation7 + $0x18] sm:$0xff] %v75
    %84 = vst [vmem:[#allocation7 + $0x20] sm:$0xff] %v76
    %85 = vst [vmem:[#allocation7 + $0x28] sm:$0xff] %v77
    %86 = vst [vmem:[#allocation7 + $0x30] sm:$0xff] %v78
    %87 = vst [vmem:[#allocation7 + $0x38] sm:$0xff] %v79
    // Predicated region
    $region18: #{tpu_custom_call.1} parent=1 // pred_check
      _
    $region19: #{tpu_custom_call.1} parent=1 // pred_check_branch
      %89 = sbr.rel (0) target = $region21
    $region20: #{tpu_custom_call.1} parent=1 // pred_region
      %91 = vsyncadd [#allocation4], 0
      %s93 = sshll.u32 [#allocation7], 4
      %s94 = int_to_ptr.vmem [resolvable:$true] %s93
      %s95 = sshll.u32 %s2, 4
      %s96 = int_to_ptr.hbm [resolvable:$true] %s95
      %98 = dma.vmem_to_hbm [thread:$0]  %s94, 1024, %s96, [#allocation4]
    $region21: #{tpu_custom_call.1} parent=1 // pred_fallthru
      _
    // Predicated region
    $region22: #{tpu_custom_call.1} parent=1 // pred_check
      _
    $region23: #{tpu_custom_call.1} parent=1 // pred_check_branch
      %100 = sbr.rel (0) target = $region25
    $region24: #{tpu_custom_call.1} parent=1 // pred_region
      %102 = dma.done [#allocation4], 1024
    $region25: #{tpu_custom_call.1} parent=1 // pred_fallthru
      _
    %103 = vsyncpa [#allocation3], 1
    %104 = vsyncpa [#allocation6], 1
    %105 = vsyncpa [#allocation4], 1

</llo_original>
